<compile_context>
chip_gen: v5e
topology: v5e:2x2
jax: 0.10.0
libtpu: 0.0.40
codegen_flags: <defaults>
</compile_context>

<pallas_src>
import functools

import jax
import jax.numpy as jnp
from jax import lax
from jax.experimental import pallas as pl
from jax.experimental.pallas import tpu as pltpu


_PAD = -1e30            # pad value: vanishes under exp() and never wins the row max
_SPLIT_MIN_BATCH = 1024  # only split a VMEM-fitting batch into 2 blocks above this


def listmle_kernel(pred_ref, out_ref, *, batch, length):
    """One batch tile of ListMLE per-row losses.

    pred_ref : (Lp, TB) f32 — gathered scores, transposed so the list axis sits
               on sublanes and the batch tile on the 128-wide lane axis.
               Padded list rows / batch columns hold _PAD.
    out_ref  : (1, 1, TB) f32 — lane-dense per-row observation-loss sums
               (padded batch columns are zeroed).
    """
    pred = pred_ref[...]                                      # (Lp, TB)
    lp, tb = pred.shape

    sub = lax.broadcasted_iota(jnp.int32, (lp, tb), 0)        # list position
    valid = sub < length

    # ---- max-stabilize over the real list entries (pad value never wins) ---
    mx = jnp.max(pred, axis=0, keepdims=True)                 # (1, TB)
    pm = pred - mx                                            # (Lp, TB)
    e = jnp.where(valid, jnp.exp(pm), 0.0)                    # (Lp, TB)

    # ---- reversed cumsum rc[j] = sum_{k >= j} e[k] ---------------------------
    # Hillis–Steele suffix scan: ceil(log2(L)) steps of sublane-rotate (XLU)
    # + masked add (VPU).  Padded list rows hold 0 and stay 0 throughout.
    rc = e
    s = 1
    while s < length:
        shifted = pltpu.roll(rc, shift=lp - s, axis=0)        # shifted[j] = rc[(j+s) % Lp]
        rc = rc + jnp.where(sub < lp - s, shifted, 0.0)       # drop wrap-around terms
        s *= 2

    # ---- observation loss, per-row (per-batch-column) sum --------------------
    obs = jnp.where(valid, jnp.log(rc + 1e-10) - pm, 0.0)     # (Lp, TB)
    per_col = jnp.sum(obs, axis=0, keepdims=True)             # (1, TB), lane-dense

    # zero padded batch columns of a ragged last block
    col = pl.program_id(0) * tb + lax.broadcasted_iota(jnp.int32, (1, tb), 1)
    per_col = jnp.where(col < batch, per_col, 0.0)
    out_ref[...] = per_col.reshape(1, 1, tb)


def _vmem_limit_bytes():
    """Scoped-VMEM limit: ~64 MiB on 128-MiB parts (v5e/v6e), 32 MiB on v7x."""
    try:
        cap = int(pltpu.get_tpu_info().vmem_capacity_bytes)
    except Exception:   # unknown target / interpret mode
        cap = 64 * 1024 * 1024
    return int(min(cap // 2, 64 * 1024 * 1024))


def _pick_tiles(B, l_pad, vmem_limit):
    """Batch (lane-axis) tile and block count.

    VMEM budget per block ~= two double-buffered (l_pad, tb) input tiles plus
    ~6 live f32 intermediates of the same shape, kept within half the scoped
    limit so the compiler and the output buffers have headroom.
    """
    bytes_per_col = (2 * 2 + 6) * l_pad * 4
    max_tb = max(128, ((vmem_limit // 2) // bytes_per_col) // 128 * 128)

    if B <= max_tb:
        # Keep a fitting batch in one full-dim block (zero padding waste) unless
        # it is large enough to be worth splitting across v7x's two TensorCores.
        nb = 2 if B >= _SPLIT_MIN_BATCH else 1
    else:
        nb = -(-B // max_tb)
        nb = -(-nb // 2) * 2                  # even block count for 2-TC balance
    tb = -(-B // nb)
    if nb > 1:
        tb = -(-tb // 128) * 128              # lane-aligned tiles when tiled
    nb = -(-B // tb)                           # recompute: minimizes batch padding
    return tb, nb


def listmle_loss(cls_score, true_rank, *, loss_weight=1.0, batch_tile=None):
    """Pallas ListMLE loss.  cls_score [B, C] float, true_rank [B, L] int."""
    cls_score = cls_score.astype(jnp.float32)
    true_rank = true_rank.astype(jnp.int32)
    B, C = cls_score.shape
    L = true_rank.shape[1]

    # Gather in the wrapper (review item 1): the kernel only ever sees the
    # (B, L) gathered predictions, cutting HBM traffic from O(B*C) to O(B*L).
    # NOTE: out-of-range indices are clamped; torch.gather would raise.
    pred = jnp.take_along_axis(cls_score, true_rank + 1, axis=1, mode="clip")

    l_pad = -(-L // 8) * 8                    # list axis -> sublanes (multiple of 8)
    vmem_limit = _vmem_limit_bytes()

    if batch_tile is not None:
        tb = int(batch_tile)
        if tb < B:
            tb = max(128, (tb // 128) * 128)  # lane-axis tiles must be 128-aligned
        nb = -(-B // tb)
    else:
        tb, nb = _pick_tiles(B, l_pad, vmem_limit)
    b_pad = nb * tb

    # Transpose so the batch tile is lane-dense and the short list axis sits on
    # sublanes; pad both axes explicitly so ragged blocks never see undefined
    # DMA contents (padded entries are masked inside the kernel).
    pred_t = jnp.pad(pred.T, ((0, l_pad - L), (0, b_pad - B)),
                     constant_values=_PAD)                      # (l_pad, b_pad)

    partials = pl.pallas_call(
        functools.partial(listmle_kernel, batch=B, length=L),
        out_shape=jax.ShapeDtypeStruct((nb, 1, tb), jnp.float32),
        grid=(nb,),
        in_specs=[pl.BlockSpec((l_pad, tb), lambda i: (0, i))],
        out_specs=pl.BlockSpec((1, 1, tb), lambda i: (i, 0, 0)),
        compiler_params=pltpu.CompilerParams(
            dimension_semantics=("parallel",),   # batch blocks shard across v7x's 2 TCs
            vmem_limit_bytes=vmem_limit,
        ),
    )(pred_t)

    # Tiny final reduction in the wrapper: mean over batch, times loss_weight.
    return jnp.sum(partials) * (loss_weight / B)


def listmle_ref(cls_score, true_rank, *, loss_weight=1.0):
    """Pure-JAX reference matching the PyTorch forward exactly."""
    pred = jnp.take_along_axis(cls_score, true_rank + 1, axis=1)
    mx = jnp.max(pred, axis=1, keepdims=True)
    pm = pred - mx
    cums = jnp.flip(jnp.cumsum(jnp.flip(jnp.exp(pm), axis=1), axis=1), axis=1)
    obs = jnp.log(cums + 1e-10) - pm
    return jnp.mean(jnp.sum(obs, axis=1)) * loss_weight


if __name__ == "__main__":
    key = jax.random.PRNGKey(0)

    # ListMLELoss has no learnable parameters; forward = gather -> max-shift ->
    # exp -> reversed cumsum -> log -> sum -> mean (reduction='mean').
    # Small demo shapes: B=20 rows, C=32 scores, ranking-list length L=8.
    B, C, L = 20, 32, 8
    k_score, k_rank, k_score2, k_rank2 = jax.random.split(key, 4)
    cls_score = jax.random.normal(k_score, (B, C), dtype=jnp.float32)
    # gather index is true_rank + 1, so draw ranks in [0, C-2]
    true_rank = jax.random.randint(k_rank, (B, L), 0, C - 1, dtype=jnp.int32)

    loss = jax.block_until_ready(listmle_loss(cls_score, true_rank, loss_weight=1.0))
    ref = listmle_ref(cls_score, true_rank, loss_weight=1.0)
    assert jnp.allclose(loss, ref, atol=1e-4, rtol=1e-5), (loss, ref)

    # Multi-block path: 3 parallel grid steps with a ragged, masked last block.
    B2 = 300
    cls_score2 = jax.random.normal(k_score2, (B2, C), dtype=jnp.float32)
    true_rank2 = jax.random.randint(k_rank2, (B2, L), 0, C - 1, dtype=jnp.int32)
    loss2 = jax.block_until_ready(
        listmle_loss(cls_score2, true_rank2, loss_weight=0.5, batch_tile=128))
    ref2 = listmle_ref(cls_score2, true_rank2, loss_weight=0.5)
    assert jnp.allclose(loss2, ref2, atol=1e-4, rtol=1e-5), (loss2, ref2)

    print("KERNEL_OK")
</pallas_src>

<mosaic_0001>
module attributes {stable_mosaic.version = 11 : i64} {
  func.func @listmle_kernel(%arg0: i32, %arg1: memref<8x20xf32, #tpu.memory_space<vmem>>, %arg2: memref<1x1x20xf32, #tpu.memory_space<vmem>>) attributes {dimension_semantics = [#tpu.dimension_semantics<parallel>], iteration_bounds = array<i64: 1>, scalar_prefetch = 0 : i64, scratch_operands = 0 : i64, tpu.core_type = #tpu.core_type<tc>, window_params = [{transform_indices = @transform_0, window_bounds = array<i64: 8, 20>}, {transform_indices = @transform_1, window_bounds = array<i64: 1, 1, 20>}]} {
    %c0 = arith.constant 0 : index
    %c0_0 = arith.constant 0 : index
    %0 = vector.load %arg1[%c0, %c0_0] : memref<8x20xf32, #tpu.memory_space<vmem>>, vector<8x20xf32>
    %1 = tpu.iota {dimensions = array<i32: 0>} : vector<8x20xi32>
    %c8_i32 = arith.constant 8 : i32
    %2 = vector.broadcast %c8_i32 : i32 to vector<8x20xi32>
    %3 = arith.cmpi slt, %1, %2 : vector<8x20xi32>
    %cst = arith.constant dense<0xFF800000> : vector<20xf32>
    %4 = vector.multi_reduction <maximumf>, %0, %cst [0] : vector<8x20xf32> to vector<20xf32>
    %5 = vector.shape_cast %4 : vector<20xf32> to vector<1x20xf32>
    %6 = vector.broadcast %5 : vector<1x20xf32> to vector<8x20xf32>
    %7 = arith.subf %0, %6 : vector<8x20xf32>
    %8 = math.exp %7 : vector<8x20xf32>
    %cst_1 = arith.constant 0.000000e+00 : f32
    %9 = vector.broadcast %cst_1 : f32 to vector<8x20xf32>
    %10 = arith.select %3, %8, %9 : vector<8x20xi1>, vector<8x20xf32>
    %c7_i32 = arith.constant 7 : i32
    %11 = tpu.dynamic_rotate %10 by %c7_i32 dim 0 : vector<8x20xf32>, i32 -> vector<8x20xf32>
    %c7_i32_2 = arith.constant 7 : i32
    %12 = vector.broadcast %c7_i32_2 : i32 to vector<8x20xi32>
    %13 = arith.cmpi slt, %1, %12 : vector<8x20xi32>
    %cst_3 = arith.constant 0.000000e+00 : f32
    %14 = vector.broadcast %cst_3 : f32 to vector<8x20xf32>
    %15 = arith.select %13, %11, %14 : vector<8x20xi1>, vector<8x20xf32>
    %16 = arith.addf %10, %15 : vector<8x20xf32>
    %c6_i32 = arith.constant 6 : i32
    %17 = tpu.dynamic_rotate %16 by %c6_i32 dim 0 : vector<8x20xf32>, i32 -> vector<8x20xf32>
    %c6_i32_4 = arith.constant 6 : i32
    %18 = vector.broadcast %c6_i32_4 : i32 to vector<8x20xi32>
    %19 = arith.cmpi slt, %1, %18 : vector<8x20xi32>
    %cst_5 = arith.constant 0.000000e+00 : f32
    %20 = vector.broadcast %cst_5 : f32 to vector<8x20xf32>
    %21 = arith.select %19, %17, %20 : vector<8x20xi1>, vector<8x20xf32>
    %22 = arith.addf %16, %21 : vector<8x20xf32>
    %c4_i32 = arith.constant 4 : i32
    %23 = tpu.dynamic_rotate %22 by %c4_i32 dim 0 : vector<8x20xf32>, i32 -> vector<8x20xf32>
    %c4_i32_6 = arith.constant 4 : i32
    %24 = vector.broadcast %c4_i32_6 : i32 to vector<8x20xi32>
    %25 = arith.cmpi slt, %1, %24 : vector<8x20xi32>
    %cst_7 = arith.constant 0.000000e+00 : f32
    %26 = vector.broadcast %cst_7 : f32 to vector<8x20xf32>
    %27 = arith.select %25, %23, %26 : vector<8x20xi1>, vector<8x20xf32>
    %28 = arith.addf %22, %27 : vector<8x20xf32>
    %cst_8 = arith.constant 1.000000e-10 : f32
    %29 = vector.broadcast %cst_8 : f32 to vector<8x20xf32>
    %30 = arith.addf %28, %29 : vector<8x20xf32>
    %31 = math.log %30 : vector<8x20xf32>
    %32 = arith.subf %31, %7 : vector<8x20xf32>
    %cst_9 = arith.constant 0.000000e+00 : f32
    %33 = vector.broadcast %cst_9 : f32 to vector<8x20xf32>
    %34 = arith.select %3, %32, %33 : vector<8x20xi1>, vector<8x20xf32>
    %cst_10 = arith.constant dense<0.000000e+00> : vector<20xf32>
    %35 = vector.multi_reduction <add>, %34, %cst_10 [0] : vector<8x20xf32> to vector<20xf32>
    %36 = vector.shape_cast %35 : vector<20xf32> to vector<1x20xf32>
    %c20_i32 = arith.constant 20 : i32
    %37 = arith.muli %arg0, %c20_i32 : i32
    %38 = tpu.iota {dimensions = array<i32: 1>} : vector<1x20xi32>
    %39 = vector.broadcast %37 : i32 to vector<1x20xi32>
    %40 = arith.addi %39, %38 : vector<1x20xi32>
    %c20_i32_11 = arith.constant 20 : i32
    %41 = vector.broadcast %c20_i32_11 : i32 to vector<1x20xi32>
    %42 = arith.cmpi slt, %40, %41 : vector<1x20xi32>
    %cst_12 = arith.constant 0.000000e+00 : f32
    %43 = vector.broadcast %cst_12 : f32 to vector<1x20xf32>
    %44 = arith.select %42, %36, %43 : vector<1x20xi1>, vector<1x20xf32>
    %45 = vector.shape_cast %44 : vector<1x20xf32> to vector<1x1x20xf32>
    %c0_13 = arith.constant 0 : index
    %c0_14 = arith.constant 0 : index
    %c0_15 = arith.constant 0 : index
    %46 = vector.load %arg2[%c0_13, %c0_14, %c0_15] : memref<1x1x20xf32, #tpu.memory_space<vmem>>, vector<1x1x20xf32>
    tpu.vector_store %arg2[%c0_13, %c0_14, %c0_15], %45 {strides = array<i32>} : memref<1x1x20xf32, #tpu.memory_space<vmem>>, vector<1x1x20xf32>,
    return
  }
  func.func @transform_0(%arg0: i32) -> (i32, i32) {
    %c0_i32 = arith.constant 0 : i32
    %c0_i32_0 = arith.constant 0 : i32
    return %c0_i32, %arg0 : i32, i32
  }
  func.func @transform_1(%arg0: i32) -> (i32, i32, i32) {
    %c0_i32 = arith.constant 0 : i32
    %c0_i32_0 = arith.constant 0 : i32
    %c0_i32_1 = arith.constant 0 : i32
    return %arg0, %c0_i32, %c0_i32_0 : i32, i32, i32
  }
}

</mosaic_0001>

<llo_original>
// kernel: tpu_custom_call.1
$region0: #{tpu_custom_call.1}
  #allocation0 [shape = 'u32[]', space=smem, size = 0x4, offset = 0x4, fixed_abs, tag = 'smem constant byte address 0x4 - core index']
  #allocation1 [shape = 'u32[72,128]{1,0:T(1,128)}', space=vmem, size = 0x9000, scoped, tag = 'internal scratch']
  %s0 = inlined_call_operand.hbm [shape: f32[8,20], index: 0, kind: input, shape index: {}]
  %s1 = inlined_call_operand.hbm [shape: f32[1,1,20], index: 1, kind: output, shape index: {}]
  %s2 = sld [smem:[#allocation0]]
  $region18: #{tpu_custom_call.1} parent=0
    _
  %s4 = ssub.s32 1, %s2
  %s5 = scalar_select 0, %s4, %s2
  $region1: #{tpu_custom_call.1} parent=0
    #allocation2 [shape = 'u8[4096]{0}', space=vmem, size = 0x1000, scoped, tag = 'input window, operand 0, single buffered']
    #allocation3 [shape = 's32[1]{0}', space=sflag, size = 0x4, scoped, tag = 'scoped memory for tpu_custom_call.1']
    #allocation4 [shape = 's32[1]{0}', space=sflag, size = 0x4, scoped, tag = 'scoped memory for tpu_custom_call.1']
    #allocation5 [shape = 'u8[512]{0}', space=vmem, size = 0x400, scoped, tag = 'output window, operand 0, single buffered']
    %6 = vsyncpa [#allocation3], 0
    %7 = vsyncpa [#allocation4], 0
    // Predicated region
    $region2: #{tpu_custom_call.1} parent=1 // pred_check
      _
    $region3: #{tpu_custom_call.1} parent=1 // pred_check_branch
      %9 = sbr.rel (0) target = $region5
    $region4: #{tpu_custom_call.1} parent=1 // pred_region
      %11 = vsyncadd [#allocation3], 0
      %s13 = sshll.u32 %s0, 4
      %s14 = int_to_ptr.hbm [resolvable:$true] %s13
      %s15 = sshll.u32 [#allocation2], 4
      %s16 = int_to_ptr.vmem [resolvable:$true] %s15
      %18 = dma.hbm_to_vmem [thread:$0]  %s14, 128, %s16, [#allocation3]
    $region5: #{tpu_custom_call.1} parent=1 // pred_fallthru
      _
    // Predicated region
    $region6: #{tpu_custom_call.1} parent=1 // pred_check
      _
    $region7: #{tpu_custom_call.1} parent=1 // pred_check_branch
      %20 = sbr.rel (0) target = $region9
    $region8: #{tpu_custom_call.1} parent=1 // pred_region
      %22 = dma.done [#allocation3], 128
    $region9: #{tpu_custom_call.1} parent=1 // pred_fallthru
      _
    %v23 = vld [vmem:[#allocation2] sm:$0xff]
    %v24 = vlaneseq
    %v25 = vshrl.u32 %v24, 7
    %vm26 = vcmp.lt.s32.totalorder %v25, 8
    %vm27 = vcmask 162816
    %v28 = vsel %vm27, %v23, -inf
    %v29 = vrot.slane %v28, 4
    %v30 = vmax.f32 %v28, %v29
    %v31 = vrot.slane %v30, 2
    %v32 = vmax.f32 %v30, %v31
    %v33 = vrot.slane %v32, 1
    %v34 = vmax.f32 %v32, %v33
    %v35 = vsub.f32 %v23, %v34
    %v36 = vmul.f32 %v35, 1.442695
    %v37 = vpow.pop %v36
    %v38 = vsel %vm26, %v37, 0.0
    %v39 = vrot.slane %v38, 1
    %vm40 = vcmp.lt.s32.totalorder %v25, 7
    %v41 = vsel %vm40, %v39, 0.0
    %v42 = vadd.f32 %v38, %v41
    %v43 = vrot.slane %v42, 2
    %vm44 = vcmp.lt.s32.totalorder %v25, 6
    %v45 = vsel %vm44, %v43, 0.0
    %v46 = vadd.f32 %v42, %v45
    %v47 = vrot.slane %v46, 4
    %vm48 = vcmp.lt.s32.totalorder %v25, 4
    %v49 = vsel %vm48, %v47, 0.0
    %v50 = vadd.f32 %v46, %v49
    %v51 = vadd.f32 %v50, 1e-10
    %v52 = vlog2.pop %v51
    %v53 = vmul.f32 %v52, 0.6931472
    %v54 = vsub.f32 %v53, %v35
    %v55 = vsel %vm26, %v54, 0.0
    %v56 = vsel %vm27, %v55, 0.0
    %v57 = vrot.slane %v56, 4
    %v58 = vadd.f32 %v56, %v57
    %v59 = vrot.slane %v58, 2
    %v60 = vadd.f32 %v58, %v59
    %v61 = vrot.slane %v60, 1
    %v62 = vadd.f32 %v60, %v61
    %s63 = smul.u32 0, 20
    %v64 = vlaneseq
    %v65 = vand.u32 %v64, 127
    %v66 = vstv %s63
    %v67 = vadd.s32 %v66, %v65
    %vm68 = vcmp.lt.s32.totalorder %v67, 20
    %v69 = vsel %vm68, %v62, 0.0
    %vm70 = vcmask 155648
    %71 = vst.msk [vmem:[#allocation5] sm:$0x1] %vm70, %v69
    // Predicated region
    $region10: #{tpu_custom_call.1} parent=1 // pred_check
      _
    $region11: #{tpu_custom_call.1} parent=1 // pred_check_branch
      %73 = sbr.rel (0) target = $region13
    $region12: #{tpu_custom_call.1} parent=1 // pred_region
      %75 = vsyncadd [#allocation4], 0
      %s77 = sshll.u32 [#allocation5], 4
      %s78 = int_to_ptr.vmem [resolvable:$true] %s77
      %s79 = sshll.u32 %s1, 4
      %s80 = int_to_ptr.hbm [resolvable:$true] %s79
      %82 = dma.vmem_to_hbm [thread:$0]  %s78, 16, %s80, [#allocation4]
    $region13: #{tpu_custom_call.1} parent=1 // pred_fallthru
      _
    // Predicated region
    $region14: #{tpu_custom_call.1} parent=1 // pred_check
      _
    $region15: #{tpu_custom_call.1} parent=1 // pred_check_branch
      %84 = sbr.rel (0) target = $region17
    $region16: #{tpu_custom_call.1} parent=1 // pred_region
      %86 = dma.done [#allocation4], 16
    $region17: #{tpu_custom_call.1} parent=1 // pred_fallthru
      _
    %87 = vsyncpa [#allocation3], 1
    %88 = vsyncpa [#allocation4], 1

</llo_original>
